<compile_context>
chip_gen: v5e
topology: v5e:2x2
jax: 0.10.0
libtpu: 0.0.40
codegen_flags: <defaults>
</compile_context>

<pallas_src>
import jax
import jax.numpy as jnp
from jax.experimental import pallas as pl
from jax.experimental.pallas import tpu as pltpu


# --------------------------------------------------------------------------- kernel

def mlp_kernel(x_ref,
               w1_ref, b1_ref,   # (F,   F/2), (1, F/2)   -- BN1 folded in
               w2_ref, b2_ref,   # (F/2, F/4), (1, F/4)   -- BN2 folded in
               w3_ref, b3_ref,   # (F/4, T),   (1, T)     -- BN3 folded in
               o_ref):
    h = x_ref[...].astype(jnp.float32)

    # relu(dense1(batch_norm1(x)))   (BN folded into w1/b1)
    h = jnp.dot(h, w1_ref[...], preferred_element_type=jnp.float32) + b1_ref[...]
    h = jnp.maximum(h, 0.0)

    # dropout2 (eval -> identity) ; relu(dense2(batch_norm2(.)))
    h = jnp.dot(h, w2_ref[...], preferred_element_type=jnp.float32) + b2_ref[...]
    h = jnp.maximum(h, 0.0)

    # dropout3 (eval -> identity) ; dense3(batch_norm3(.))
    o_ref[...] = (jnp.dot(h, w3_ref[...], preferred_element_type=jnp.float32)
                  + b3_ref[...]).astype(o_ref.dtype)


# --------------------------------------------------------------------------- wrapper

def _round_up(n, m):
    return ((n + m - 1) // m) * m


def mlp_model(x, kp, *, tile_b=2048):
    """x: (batch, num_features) f32; kp: folded params from fold_params()."""
    n, f = x.shape
    t = kp["w3"].shape[1]

    # Batch tile: multiple of 8 (sublane), capped by the (padded) batch size.
    tile_b = min(tile_b, _round_up(n, 8))
    n_pad = _round_up(n, tile_b)
    if n_pad != n:
        x = jnp.pad(x, ((0, n_pad - n), (0, 0)))

    grid = (n_pad // tile_b,)

    def batch_map(i):      # x / out: walk the batch tiles
        return (i, 0)

    def resident_map(i):   # weights / biases: same block every step -> stay in VMEM
        return (0, 0)

    in_specs = [
        pl.BlockSpec((tile_b, f), batch_map),
        pl.BlockSpec(kp["w1"].shape, resident_map),
        pl.BlockSpec(kp["b1"].shape, resident_map),
        pl.BlockSpec(kp["w2"].shape, resident_map),
        pl.BlockSpec(kp["b2"].shape, resident_map),
        pl.BlockSpec(kp["w3"].shape, resident_map),
        pl.BlockSpec(kp["b3"].shape, resident_map),
    ]
    out_spec = pl.BlockSpec((tile_b, t), batch_map)

    out = pl.pallas_call(
        mlp_kernel,
        out_shape=jax.ShapeDtypeStruct((n_pad, t), x.dtype),
        grid=grid,
        in_specs=in_specs,
        out_specs=out_spec,
        compiler_params=pltpu.CompilerParams(
            dimension_semantics=("parallel",)),
    )(x, kp["w1"], kp["b1"], kp["w2"], kp["b2"], kp["w3"], kp["b3"])

    return out[:n]


# --------------------------------------------------------------------------- params

def _weight_norm(v, g):
    # PyTorch weight_norm default dim=0 on Linear weight (out, in):
    # W[o, :] = g[o] * V[o, :] / ||V[o, :]||_2
    norm = jnp.sqrt(jnp.sum(v * v, axis=1, keepdims=True))
    return g[:, None] * v / norm


def make_raw_params(key, num_features, num_targets):
    f1, f2, f4 = num_features, num_features // 2, num_features // 4
    ks = jax.random.split(key, 10)

    def lin(kv, kg, kb, fin, fout):
        v = jax.random.normal(kv, (fout, fin), jnp.float32) * 0.1
        g = 1.0 + 0.05 * jax.random.normal(kg, (fout,), jnp.float32)
        b = 0.05 * jax.random.normal(kb, (fout,), jnp.float32)
        w_eff = _weight_norm(v, g)          # (out, in)
        return w_eff.T, b                   # (in, out) so that y = x @ W + b

    def bn(k, n):
        kg, kb, km, kv = jax.random.split(k, 4)
        gamma = 1.0 + 0.1 * jax.random.normal(kg, (n,), jnp.float32)
        beta = 0.1 * jax.random.normal(kb, (n,), jnp.float32)
        mean = 0.1 * jax.random.normal(km, (n,), jnp.float32)
        var = 1.0 + 0.1 * jnp.abs(jax.random.normal(kv, (n,), jnp.float32))
        return gamma, beta, mean, var

    w1, b1 = lin(ks[0], ks[1], ks[2], f1, f2)
    w2, b2 = lin(ks[3], ks[4], ks[5], f2, f4)
    w3, b3 = lin(ks[6], ks[7], ks[8], f4, num_targets)

    return dict(bn1=bn(jax.random.fold_in(ks[9], 1), f1),
                bn2=bn(jax.random.fold_in(ks[9], 2), f2),
                bn3=bn(jax.random.fold_in(ks[9], 3), f4),
                w1=w1, b1=b1, w2=w2, b2=b2, w3=w3, b3=b3)


def _bn_scale_shift(gamma, beta, mean, var, eps=1e-5):
    scale = gamma / jnp.sqrt(var + eps)
    shift = beta - mean * scale
    return scale, shift


def fold_params(raw):
    """Fold each BatchNorm's affine into the following Linear (inference-exact)."""
    out = {}
    for bn_key, wk, bk in (("bn1", "w1", "b1"),
                           ("bn2", "w2", "b2"),
                           ("bn3", "w3", "b3")):
        scale, shift = _bn_scale_shift(*raw[bn_key])
        w, b = raw[wk], raw[bk]
        out[wk] = scale[:, None] * w                 # (fin, fout)
        out[bk] = (shift @ w + b)[None, :]           # (1, fout)
    return out


# --------------------------------------------------------------------------- reference

def mlp_model_ref(x, raw):
    def bn(h, gamma, beta, mean, var, eps=1e-5):
        return (h - mean) * (gamma / jnp.sqrt(var + eps)) + beta

    h = bn(x, *raw["bn1"])
    h = jnp.maximum(h @ raw["w1"] + raw["b1"], 0.0)
    h = bn(h, *raw["bn2"])
    h = jnp.maximum(h @ raw["w2"] + raw["b2"], 0.0)
    h = bn(h, *raw["bn3"])
    return h @ raw["w3"] + raw["b3"]


# --------------------------------------------------------------------------- main

if __name__ == "__main__":
    key = jax.random.PRNGKey(0)
    kx, kp_key, kx2 = jax.random.split(key, 3)

    batch, num_features, num_targets, hidden_size = 8, 32, 4, 64  # hidden_size unused by the module
    raw = make_raw_params(kp_key, num_features, num_targets)
    kp = fold_params(raw)

    # Small batch: single grid step.
    x = jax.random.normal(kx, (batch, num_features), jnp.float32)
    out = jax.block_until_ready(mlp_model(x, kp))
    ref = mlp_model_ref(x, raw)
    assert out.shape == (batch, num_targets)
    assert jnp.allclose(out, ref, atol=1e-4, rtol=1e-4), float(jnp.max(jnp.abs(out - ref)))

    # Larger, non-multiple batch: exercises the tiled/pipelined grid + padding path.
    x2 = jax.random.normal(kx2, (1030, num_features), jnp.float32)
    out2 = jax.block_until_ready(mlp_model(x2, kp, tile_b=256))
    ref2 = mlp_model_ref(x2, raw)
    assert out2.shape == (1030, num_targets)
    assert jnp.allclose(out2, ref2, atol=1e-4, rtol=1e-4), float(jnp.max(jnp.abs(out2 - ref2)))

    # TODO(synk): BatchNorm/Dropout use inference semantics; training-mode batch stats and
    # stochastic dropout masks are not generated here.
    print("KERNEL_OK")
</pallas_src>

<mosaic_0001>
module attributes {stable_mosaic.version = 11 : i64} {
  func.func @mlp_kernel(%arg0: i32, %arg1: memref<8x32xf32, #tpu.memory_space<vmem>>, %arg2: memref<32x16xf32, #tpu.memory_space<vmem>>, %arg3: memref<1x16xf32, #tpu.memory_space<vmem>>, %arg4: memref<16x8xf32, #tpu.memory_space<vmem>>, %arg5: memref<1x8xf32, #tpu.memory_space<vmem>>, %arg6: memref<8x4xf32, #tpu.memory_space<vmem>>, %arg7: memref<1x4xf32, #tpu.memory_space<vmem>>, %arg8: memref<8x4xf32, #tpu.memory_space<vmem>>) attributes {dimension_semantics = [#tpu.dimension_semantics<parallel>], iteration_bounds = array<i64: 1>, scalar_prefetch = 0 : i64, scratch_operands = 0 : i64, tpu.core_type = #tpu.core_type<tc>, window_params = [{transform_indices = @transform_0, window_bounds = array<i64: 8, 32>}, {pipeline_mode = #tpu.pipeline_mode<synchronous>, transform_indices = @transform_1, window_bounds = array<i64: 32, 16>}, {pipeline_mode = #tpu.pipeline_mode<synchronous>, transform_indices = @transform_2, window_bounds = array<i64: 1, 16>}, {pipeline_mode = #tpu.pipeline_mode<synchronous>, transform_indices = @transform_3, window_bounds = array<i64: 16, 8>}, {pipeline_mode = #tpu.pipeline_mode<synchronous>, transform_indices = @transform_4, window_bounds = array<i64: 1, 8>}, {pipeline_mode = #tpu.pipeline_mode<synchronous>, transform_indices = @transform_5, window_bounds = array<i64: 8, 4>}, {pipeline_mode = #tpu.pipeline_mode<synchronous>, transform_indices = @transform_6, window_bounds = array<i64: 1, 4>}, {transform_indices = @transform_7, window_bounds = array<i64: 8, 4>}]} {
    %c0 = arith.constant 0 : index
    %c0_0 = arith.constant 0 : index
    %0 = vector.load %arg1[%c0, %c0_0] : memref<8x32xf32, #tpu.memory_space<vmem>>, vector<8x32xf32>
    %c0_1 = arith.constant 0 : index
    %c0_2 = arith.constant 0 : index
    %1 = vector.load %arg2[%c0_1, %c0_2] : memref<32x16xf32, #tpu.memory_space<vmem>>, vector<32x16xf32>
    %cst = arith.constant dense<0.000000e+00> : vector<8x16xf32>
    %2 = tpu.matmul %0, %1, %cst {dimension_numbers = #tpu.dot_dimension_numbers<[1], [0], [0], [1], [0, 0, 1, 1], [], []>} : vector<8x32xf32>, vector<32x16xf32>, vector<8x16xf32> -> vector<8x16xf32>
    %c0_3 = arith.constant 0 : index
    %c0_4 = arith.constant 0 : index
    %3 = vector.load %arg3[%c0_3, %c0_4] : memref<1x16xf32, #tpu.memory_space<vmem>>, vector<1x16xf32>
    %4 = vector.broadcast %3 : vector<1x16xf32> to vector<8x16xf32>
    %5 = arith.addf %2, %4 : vector<8x16xf32>
    %cst_5 = arith.constant 0.000000e+00 : f32
    %6 = vector.broadcast %cst_5 : f32 to vector<8x16xf32>
    %7 = arith.maximumf %5, %6 : vector<8x16xf32>
    %c0_6 = arith.constant 0 : index
    %c0_7 = arith.constant 0 : index
    %8 = vector.load %arg4[%c0_6, %c0_7] : memref<16x8xf32, #tpu.memory_space<vmem>>, vector<16x8xf32>
    %cst_8 = arith.constant dense<0.000000e+00> : vector<8x8xf32>
    %9 = tpu.matmul %7, %8, %cst_8 {dimension_numbers = #tpu.dot_dimension_numbers<[1], [0], [0], [1], [0, 0, 1, 1], [], []>} : vector<8x16xf32>, vector<16x8xf32>, vector<8x8xf32> -> vector<8x8xf32>
    %c0_9 = arith.constant 0 : index
    %c0_10 = arith.constant 0 : index
    %10 = vector.load %arg5[%c0_9, %c0_10] : memref<1x8xf32, #tpu.memory_space<vmem>>, vector<1x8xf32>
    %11 = vector.broadcast %10 : vector<1x8xf32> to vector<8x8xf32>
    %12 = arith.addf %9, %11 : vector<8x8xf32>
    %cst_11 = arith.constant 0.000000e+00 : f32
    %13 = vector.broadcast %cst_11 : f32 to vector<8x8xf32>
    %14 = arith.maximumf %12, %13 : vector<8x8xf32>
    %c0_12 = arith.constant 0 : index
    %c0_13 = arith.constant 0 : index
    %15 = vector.load %arg6[%c0_12, %c0_13] : memref<8x4xf32, #tpu.memory_space<vmem>>, vector<8x4xf32>
    %cst_14 = arith.constant dense<0.000000e+00> : vector<8x4xf32>
    %16 = tpu.matmul %14, %15, %cst_14 {dimension_numbers = #tpu.dot_dimension_numbers<[1], [0], [0], [1], [0, 0, 1, 1], [], []>} : vector<8x8xf32>, vector<8x4xf32>, vector<8x4xf32> -> vector<8x4xf32>
    %c0_15 = arith.constant 0 : index
    %c0_16 = arith.constant 0 : index
    %17 = vector.load %arg7[%c0_15, %c0_16] : memref<1x4xf32, #tpu.memory_space<vmem>>, vector<1x4xf32>
    %18 = vector.broadcast %17 : vector<1x4xf32> to vector<8x4xf32>
    %19 = arith.addf %16, %18 : vector<8x4xf32>
    %c0_17 = arith.constant 0 : index
    %c0_18 = arith.constant 0 : index
    %20 = vector.load %arg8[%c0_17, %c0_18] : memref<8x4xf32, #tpu.memory_space<vmem>>, vector<8x4xf32>
    tpu.vector_store %arg8[%c0_17, %c0_18], %19 {strides = array<i32>} : memref<8x4xf32, #tpu.memory_space<vmem>>, vector<8x4xf32>,
    return
  }
  func.func @transform_0(%arg0: i32) -> (i32, i32) {
    %c0_i32 = arith.constant 0 : i32
    %c0_i32_0 = arith.constant 0 : i32
    return %arg0, %c0_i32 : i32, i32
  }
  func.func @transform_1(%arg0: i32) -> (i32, i32) {
    %c0_i32 = arith.constant 0 : i32
    %c0_i32_0 = arith.constant 0 : i32
    %c0_i32_1 = arith.constant 0 : i32
    return %c0_i32, %c0_i32_0 : i32, i32
  }
  func.func @transform_2(%arg0: i32) -> (i32, i32) {
    %c0_i32 = arith.constant 0 : i32
    %c0_i32_0 = arith.constant 0 : i32
    %c0_i32_1 = arith.constant 0 : i32
    return %c0_i32, %c0_i32_0 : i32, i32
  }
  func.func @transform_3(%arg0: i32) -> (i32, i32) {
    %c0_i32 = arith.constant 0 : i32
    %c0_i32_0 = arith.constant 0 : i32
    %c0_i32_1 = arith.constant 0 : i32
    return %c0_i32, %c0_i32_0 : i32, i32
  }
  func.func @transform_4(%arg0: i32) -> (i32, i32) {
    %c0_i32 = arith.constant 0 : i32
    %c0_i32_0 = arith.constant 0 : i32
    %c0_i32_1 = arith.constant 0 : i32
    return %c0_i32, %c0_i32_0 : i32, i32
  }
  func.func @transform_5(%arg0: i32) -> (i32, i32) {
    %c0_i32 = arith.constant 0 : i32
    %c0_i32_0 = arith.constant 0 : i32
    %c0_i32_1 = arith.constant 0 : i32
    return %c0_i32, %c0_i32_0 : i32, i32
  }
  func.func @transform_6(%arg0: i32) -> (i32, i32) {
    %c0_i32 = arith.constant 0 : i32
    %c0_i32_0 = arith.constant 0 : i32
    %c0_i32_1 = arith.constant 0 : i32
    return %c0_i32, %c0_i32_0 : i32, i32
  }
  func.func @transform_7(%arg0: i32) -> (i32, i32) {
    %c0_i32 = arith.constant 0 : i32
    %c0_i32_0 = arith.constant 0 : i32
    return %arg0, %c0_i32 : i32, i32
  }
}

</mosaic_0001>

<llo_original>
// kernel: tpu_custom_call.1
$region0: #{tpu_custom_call.1}
  #allocation0 [shape = 'u32[]', space=smem, size = 0x4, offset = 0x4, fixed_abs, tag = 'smem constant byte address 0x4 - core index']
  #allocation1 [shape = 'u32[72,128]{1,0:T(1,128)}', space=vmem, size = 0x9000, scoped, tag = 'internal scratch']
  %s0 = inlined_call_operand.vmem [shape: f32[8,32], index: 0, kind: input, shape index: {}]
  %s1 = inlined_call_operand.vmem [shape: f32[32,16], index: 1, kind: input, shape index: {}]
  %s2 = inlined_call_operand.vmem [shape: f32[1,16], index: 2, kind: input, shape index: {}]
  %s3 = inlined_call_operand.vmem [shape: f32[16,8], index: 3, kind: input, shape index: {}]
  %s4 = inlined_call_operand.vmem [shape: f32[1,8], index: 4, kind: input, shape index: {}]
  %s5 = inlined_call_operand.vmem [shape: f32[8,4], index: 5, kind: input, shape index: {}]
  %s6 = inlined_call_operand.vmem [shape: f32[1,4], index: 6, kind: input, shape index: {}]
  %s7 = inlined_call_operand.vmem [shape: f32[8,4], index: 7, kind: output, shape index: {}]
  %s8 = sld [smem:[#allocation0]]
  $region38: #{tpu_custom_call.1} parent=0
    _
  %s10 = ssub.s32 1, %s8
  %s11 = scalar_select 0, %s10, %s8
  // Predicated region
  $region2: #{tpu_custom_call.1} parent=0 // pred_check
    _
  $region3: #{tpu_custom_call.1} parent=0 // pred_check_branch
    %13 = sbr.rel (0) target = $region5
  $region4: #{tpu_custom_call.1} parent=0 // pred_region
    _
  $region5: #{tpu_custom_call.1} parent=0 // pred_fallthru
    _
  // Predicated region
  $region6: #{tpu_custom_call.1} parent=0 // pred_check
    _
  $region7: #{tpu_custom_call.1} parent=0 // pred_check_branch
    %15 = sbr.rel (0) target = $region9
  $region8: #{tpu_custom_call.1} parent=0 // pred_region
    _
  $region9: #{tpu_custom_call.1} parent=0 // pred_fallthru
    _
  // Predicated region
  $region10: #{tpu_custom_call.1} parent=0 // pred_check
    _
  $region11: #{tpu_custom_call.1} parent=0 // pred_check_branch
    %17 = sbr.rel (0) target = $region13
  $region12: #{tpu_custom_call.1} parent=0 // pred_region
    _
  $region13: #{tpu_custom_call.1} parent=0 // pred_fallthru
    _
  // Predicated region
  $region14: #{tpu_custom_call.1} parent=0 // pred_check
    _
  $region15: #{tpu_custom_call.1} parent=0 // pred_check_branch
    %19 = sbr.rel (0) target = $region17
  $region16: #{tpu_custom_call.1} parent=0 // pred_region
    _
  $region17: #{tpu_custom_call.1} parent=0 // pred_fallthru
    _
  // Predicated region
  $region18: #{tpu_custom_call.1} parent=0 // pred_check
    _
  $region19: #{tpu_custom_call.1} parent=0 // pred_check_branch
    %21 = sbr.rel (0) target = $region21
  $region20: #{tpu_custom_call.1} parent=0 // pred_region
    _
  $region21: #{tpu_custom_call.1} parent=0 // pred_fallthru
    _
  // Predicated region
  $region22: #{tpu_custom_call.1} parent=0 // pred_check
    _
  $region23: #{tpu_custom_call.1} parent=0 // pred_check_branch
    %23 = sbr.rel (0) target = $region25
  $region24: #{tpu_custom_call.1} parent=0 // pred_region
    _
  $region25: #{tpu_custom_call.1} parent=0 // pred_fallthru
    _
  // Predicated region
  $region26: #{tpu_custom_call.1} parent=0 // pred_check
    _
  $region27: #{tpu_custom_call.1} parent=0 // pred_check_branch
    %25 = sbr.rel (0) target = $region29
  $region28: #{tpu_custom_call.1} parent=0 // pred_region
    _
  $region29: #{tpu_custom_call.1} parent=0 // pred_fallthru
    _
  %v26 = vld [vmem:[%s0] sm:$0xff]
  %v27 = vld [vmem:[%s1] sm:$0xff]
  %v28 = vld [vmem:[%s1 + $0x8] sm:$0xff]
  %v29 = vld [vmem:[%s1 + $0x10] sm:$0xff]
  %v30 = vld [vmem:[%s1 + $0x18] sm:$0xff]
  %v31 = vld [vmem:[%s2] sm:$0x1]
  %v33 = vperm.slane %v31, 0
  %vm35 = vcmask 261120
  %v37 = vsel %vm35, %v26, 0
  %39 = vmatpush.msra.mxu0 0.0
  %40 = vmatpush.msra.mxu0 0.0
  %41 = vmatpush.msra.mxu0 0.0
  %42 = vmatpush.msra.mxu0 0.0
  %43 = vmatpush.msra.mxu0 0.0
  %44 = vmatpush.msra.mxu0 0.0
  %45 = vmatpush.msra.mxu0 0.0
  %46 = vmatpush.msra.mxu0 0.0
  %47 = vmatpush.msra.mxu0 0.0
  %48 = vmatpush.msra.mxu0 0.0
  %49 = vmatpush.msra.mxu0 0.0
  %50 = vmatpush.msra.mxu0 0.0
  %51 = vmatpush.msra.mxu0 %v30
  %52 = vmatpush.msra.mxu0 %v29
  %53 = vmatpush.msra.mxu0 %v28
  %54 = vmatpush.msra.mxu0 %v27
  %55 = vmatmul.f32.gmra.mxu0 %v37
  %v56 = vpop.f32.mrf.mxu0
  %v57 = vadd.f32 %v33, %v56
  %58 = vdwg.mxu0
  %v59 = vmax.f32 %v57, 0.0
  %v60 = vld [vmem:[%s3] sm:$0xff]
  %v61 = vld [vmem:[%s3 + $0x8] sm:$0xff]
  %v62 = vld [vmem:[%s4] sm:$0x1]
  %v64 = vperm.slane %v62, 0
  %vm66 = vcmask 130048
  %v68 = vsel %vm66, %v59, 0
  %70 = vmatpush.msra.mxu0 0.0
  %71 = vmatpush.msra.mxu0 0.0
  %72 = vmatpush.msra.mxu0 0.0
  %73 = vmatpush.msra.mxu0 0.0
  %74 = vmatpush.msra.mxu0 0.0
  %75 = vmatpush.msra.mxu0 0.0
  %76 = vmatpush.msra.mxu0 0.0
  %77 = vmatpush.msra.mxu0 0.0
  %78 = vmatpush.msra.mxu0 0.0
  %79 = vmatpush.msra.mxu0 0.0
  %80 = vmatpush.msra.mxu0 0.0
  %81 = vmatpush.msra.mxu0 0.0
  %82 = vmatpush.msra.mxu0 0.0
  %83 = vmatpush.msra.mxu0 0.0
  %84 = vmatpush.msra.mxu0 %v61
  %85 = vmatpush.msra.mxu0 %v60
  %86 = vmatmul.f32.gmra.mxu0 %v68
  %v87 = vpop.f32.mrf.mxu0
  %v88 = vadd.f32 %v64, %v87
  %89 = vdwg.mxu0
  %v90 = vmax.f32 %v88, 0.0
  %v91 = vld [vmem:[%s5] sm:$0xff]
  %v92 = vld [vmem:[%s6] sm:$0x1]
  %v94 = vperm.slane %v92, 0
  %vm96 = vcmask 64512
  %v98 = vsel %vm96, %v90, 0
  %100 = vmatpush.msra.mxu0 0.0
  %101 = vmatpush.msra.mxu0 0.0
  %102 = vmatpush.msra.mxu0 0.0
  %103 = vmatpush.msra.mxu0 0.0
  %104 = vmatpush.msra.mxu0 0.0
  %105 = vmatpush.msra.mxu0 0.0
  %106 = vmatpush.msra.mxu0 0.0
  %107 = vmatpush.msra.mxu0 0.0
  %108 = vmatpush.msra.mxu0 0.0
  %109 = vmatpush.msra.mxu0 0.0
  %110 = vmatpush.msra.mxu0 0.0
  %111 = vmatpush.msra.mxu0 0.0
  %112 = vmatpush.msra.mxu0 0.0
  %113 = vmatpush.msra.mxu0 0.0
  %114 = vmatpush.msra.mxu0 0.0
  %115 = vmatpush.msra.mxu0 %v91
  %116 = vmatmul.f32.gmra.mxu0 %v98
  %v117 = vpop.f32.mrf.mxu0
  %v118 = vadd.f32 %v94, %v117
  %119 = vdwg.mxu0
  %vm120 = vcmask 31744
  %121 = vst.msk [vmem:[%s7] sm:$0xff] %vm120, %v118
  // Predicated region
  $region30: #{tpu_custom_call.1} parent=0 // pred_check
    _
  $region31: #{tpu_custom_call.1} parent=0 // pred_check_branch
    %123 = sbr.rel (0) target = $region33
  $region32: #{tpu_custom_call.1} parent=0 // pred_region
    _
  $region33: #{tpu_custom_call.1} parent=0 // pred_fallthru
    _
  // Predicated region
  $region34: #{tpu_custom_call.1} parent=0 // pred_check
    _
  $region35: #{tpu_custom_call.1} parent=0 // pred_check_branch
    %125 = sbr.rel (0) target = $region37
  $region36: #{tpu_custom_call.1} parent=0 // pred_region
    _
  $region37: #{tpu_custom_call.1} parent=0 // pred_fallthru
    _

</llo_original>
